<compile_context>
chip_gen: v5e
topology: v5e:2x2
jax: 0.10.0
libtpu: 0.0.40
codegen_flags: <defaults>
</compile_context>

<pallas_src>
import numpy as np
import jax
import jax.numpy as jnp
from jax.experimental import pallas as pl
from jax.experimental.pallas import tpu as pltpu


def _upsample1d_kernel(x_ref, w_ref, b_ref, o_ref, acc_ref, xpad_ref):
    """One (tb sequences) x (input-channel chunk) step of the transposed conv.

    x_ref   : (tb, L, tk)      input tile (input-channel chunk k)
    w_ref   : (4, tk, C)       the 4 taps, rows = same input-channel chunk
    b_ref   : (1, 2C)          [bias ‖ bias]
    o_ref   : (tb*L, 2C)       output tile, lanes = [even ‖ odd]
    acc_ref : (tb*L, 2C) f32   accumulator over input-channel chunks
    xpad_ref: (tb, L+2, tk)    zero-padded staging buffer for the +-1 shifts
    """
    k = pl.program_id(1)
    nk = pl.num_programs(1)
    tb, L, tk = x_ref.shape
    R = tb * L

    xv = x_ref[...]                                      # (tb, L, tk)

    # Stage the tile with one zero row on each side of every sequence so the
    # shifted operands are plain static windows of the buffer (the zero rows
    # implement the per-sequence boundary conditions).
    zero_row = jnp.zeros((tb, 1, tk), xv.dtype)
    xpad_ref[:, 0:1, :] = zero_row
    xpad_ref[:, L + 1:L + 2, :] = zero_row
    xpad_ref[:, 1:L + 1, :] = xv

    xc = xv.reshape(R, tk)                               # x[m]
    xp = xpad_ref[:, 0:L, :].reshape(R, tk)              # x[m-1] (0 at m=0)
    xn = xpad_ref[:, 2:L + 2, :].reshape(R, tk)          # x[m+1] (0 at m=L-1)

    w0 = w_ref[0]                                        # (tk, C) per tap
    w1 = w_ref[1]
    w2 = w_ref[2]
    w3 = w_ref[3]

    even = (jnp.dot(xc, w1, preferred_element_type=jnp.float32)
            + jnp.dot(xp, w3, preferred_element_type=jnp.float32))
    odd = (jnp.dot(xc, w2, preferred_element_type=jnp.float32)
           + jnp.dot(xn, w0, preferred_element_type=jnp.float32))
    contrib = jnp.concatenate([even, odd], axis=-1)      # (R, 2C)

    @pl.when(k == 0)
    def _():
        acc_ref[...] = contrib + b_ref[...]

    @pl.when(k > 0)
    def _():
        acc_ref[...] = acc_ref[...] + contrib

    @pl.when(k == nk - 1)
    def _():
        o_ref[...] = acc_ref[...].astype(o_ref.dtype)


def _pick_tk(c):
    """Input-channel (contraction) tile: bounds the resident weight slab."""
    budget = 8 * 1024 * 1024            # bytes per (4, tk, C) f32 weight buffer
    for cand in (c, 512, 256, 128):
        if cand <= c and c % cand == 0 and 4 * cand * c * 4 <= budget:
            return cand
    return 128 if c % 128 == 0 else c


def _pick_tb(batch, length, c, target_rows=512):
    """Sequences per grid step: large row tiles with bounded output-block VMEM."""
    row_cap = max(8, (8 * 1024 * 1024) // (8 * c))   # ~8 MiB output block
    target = min(target_rows, row_cap)
    cands = [d for d in range(1, batch + 1)
             if batch % d == 0 and ((d * length) % 8 == 0 or d == batch)]
    small = [d for d in cands if d * length <= target]
    return max(small) if small else min(cands)


def upsample1d_nlc(x_nlc, weight, bias, *, target_rows=512):
    """ConvTranspose1d(dim, dim, 4, 2, 1) on channels-last activations.

    x_nlc:  (B, L, C); weight: (C_in, C_out, 4) PyTorch layout; bias: (C,)
    returns (B, 2L, C).
    """
    B, L, C = x_nlc.shape
    assert weight.shape == (C, C, 4)
    assert bias.shape == (C,)

    # Pad channels to a multiple of 128: lane-dense (unmasked) stores and full
    # MXU columns.  Padded channels are zero -> no effect on the real outputs.
    Cp = -(-C // 128) * 128
    if Cp != C:
        x_nlc = jnp.pad(x_nlc, ((0, 0), (0, 0), (0, Cp - C)))
        weight = jnp.pad(weight, ((0, Cp - C), (0, Cp - C), (0, 0)))
        bias = jnp.pad(bias, (0, Cp - C))

    w4 = jnp.transpose(weight, (2, 0, 1))                  # (4, C_in, C_out)
    b2 = jnp.concatenate([bias, bias]).reshape(1, 2 * Cp)  # [even b ‖ odd b]

    tb = _pick_tb(B, L, Cp, target_rows)
    tk = _pick_tk(Cp)
    R = tb * L
    grid = (B // tb, Cp // tk)      # (row tiles: parallel, contraction: arbitrary)

    out2 = pl.pallas_call(
        _upsample1d_kernel,
        out_shape=jax.ShapeDtypeStruct((B * L, 2 * Cp), x_nlc.dtype),
        grid_spec=pltpu.PrefetchScalarGridSpec(
            num_scalar_prefetch=0,
            grid=grid,
            in_specs=[
                pl.BlockSpec((tb, L, tk), lambda i, k: (i, 0, k)),
                pl.BlockSpec((4, tk, Cp), lambda i, k: (0, k, 0)),
                pl.BlockSpec((1, 2 * Cp), lambda i, k: (0, 0)),
            ],
            out_specs=pl.BlockSpec((R, 2 * Cp), lambda i, k: (i, 0)),
            scratch_shapes=[
                pltpu.VMEM((R, 2 * Cp), jnp.float32),       # accumulator
                pltpu.VMEM((tb, L + 2, tk), x_nlc.dtype),   # shift staging
            ],
        ),
        compiler_params=pltpu.CompilerParams(
            dimension_semantics=("parallel", "arbitrary"),
            vmem_limit_bytes=64 * 1024 * 1024,
        ),
    )(x_nlc, w4, b2)

    # (B*L, 2C) -> (B, 2L, C) is a pure row-major reshape: lane-half 0 of row
    # (b, m) lands at t = 2m and lane-half 1 at t = 2m+1, i.e. the even/odd
    # interleave is free (no extra HBM pass).
    out = out2.reshape(B, 2 * L, Cp)
    if Cp != C:
        out = out[:, :, :C]
    return out


def upsample1d(x_ncl, weight, bias, *, target_rows=512):
    """PyTorch-layout wrapper: x (B, C, L) -> (B, C, 2L).

    NOTE: if the surrounding model can carry activations channels-last,
    call `upsample1d_nlc` directly and drop both transposes (each one is a
    full extra HBM pass for this memory-bound op).
    """
    x_nlc = jnp.transpose(x_ncl, (0, 2, 1))
    out_nlc = upsample1d_nlc(x_nlc, weight, bias, target_rows=target_rows)
    return jnp.transpose(out_nlc, (0, 2, 1))


def _reference_conv_transpose1d(x, w, b):
    """Naive numpy ConvTranspose1d(stride=2, padding=1, k=4) reference."""
    B, C_in, L = x.shape
    _, C_out, K = w.shape
    stride, pad = 2, 1
    L_out = (L - 1) * stride - 2 * pad + K
    out = np.tile(b.reshape(1, C_out, 1), (B, 1, L_out)).astype(np.float64)
    for bidx in range(B):
        for l in range(L):
            for k in range(K):
                t = l * stride - pad + k
                if 0 <= t < L_out:
                    out[bidx, :, t] += x[bidx, :, l] @ w[:, :, k]
    return out


if __name__ == "__main__":
    B, C, L = 2, 4, 16
    key = jax.random.PRNGKey(0)
    kx, kw, kb = jax.random.split(key, 3)

    x = jax.random.normal(kx, (B, C, L), dtype=jnp.float32)
    # deterministic synthetic params matching ConvTranspose1d(C, C, 4) shapes
    fan = C * 4
    bound = 1.0 / np.sqrt(fan)
    weight = jax.random.uniform(kw, (C, C, 4), jnp.float32, -bound, bound)
    bias = jax.random.uniform(kb, (C,), jnp.float32, -bound, bound)

    out = upsample1d(x, weight, bias)
    out = jax.block_until_ready(out)

    ref = _reference_conv_transpose1d(np.asarray(x, np.float64),
                                      np.asarray(weight, np.float64),
                                      np.asarray(bias, np.float64))
    assert out.shape == (B, C, 2 * L), out.shape
    np.testing.assert_allclose(np.asarray(out, np.float64), ref,
                               rtol=1e-5, atol=1e-5)
    print("KERNEL_OK")
</pallas_src>

<mosaic_0001>
module attributes {stable_mosaic.version = 11 : i64} {
  func.func @_upsample1d_kernel(%arg0: i32, %arg1: i32, %arg2: memref<2x16x128xf32, #tpu.memory_space<vmem>>, %arg3: memref<4x128x128xf32, #tpu.memory_space<vmem>>, %arg4: memref<1x256xf32, #tpu.memory_space<vmem>>, %arg5: memref<32x256xf32, #tpu.memory_space<vmem>>, %arg6: memref<32x256xf32, #tpu.memory_space<vmem>>, %arg7: memref<2x18x128xf32, #tpu.memory_space<vmem>>) attributes {dimension_semantics = [#tpu.dimension_semantics<parallel>, #tpu.dimension_semantics<arbitrary>], iteration_bounds = array<i64: 1, 1>, scalar_prefetch = 0 : i64, scratch_operands = 2 : i64, tpu.core_type = #tpu.core_type<tc>, window_params = [{transform_indices = @transform_0, window_bounds = array<i64: 2, 16, 128>}, {transform_indices = @transform_1, window_bounds = array<i64: 4, 128, 128>}, {pipeline_mode = #tpu.pipeline_mode<synchronous>, transform_indices = @transform_2, window_bounds = array<i64: 1, 256>}, {transform_indices = @transform_3, window_bounds = array<i64: 32, 256>}]} {
    %c0 = arith.constant 0 : index
    %c0_0 = arith.constant 0 : index
    %c0_1 = arith.constant 0 : index
    %0 = vector.load %arg2[%c0, %c0_0, %c0_1] : memref<2x16x128xf32, #tpu.memory_space<vmem>>, vector<2x16x128xf32>
    %cst = arith.constant 0.000000e+00 : f32
    %1 = vector.broadcast %cst : f32 to vector<2x1x128xf32>
    %c0_2 = arith.constant 0 : index
    %c0_3 = arith.constant 0 : index
    %c0_4 = arith.constant 0 : index
    %2 = vector.load %arg7[%c0_2, %c0_3, %c0_4] : memref<2x18x128xf32, #tpu.memory_space<vmem>>, vector<2x1x128xf32>
    tpu.vector_store %arg7[%c0_2, %c0_3, %c0_4], %1 {strides = array<i32>} : memref<2x18x128xf32, #tpu.memory_space<vmem>>, vector<2x1x128xf32>,
    %c0_5 = arith.constant 0 : index
    %c17 = arith.constant 17 : index
    %c0_6 = arith.constant 0 : index
    %3 = vector.load %arg7[%c0_5, %c17, %c0_6] : memref<2x18x128xf32, #tpu.memory_space<vmem>>, vector<2x1x128xf32>
    tpu.vector_store %arg7[%c0_5, %c17, %c0_6], %1 {strides = array<i32>} : memref<2x18x128xf32, #tpu.memory_space<vmem>>, vector<2x1x128xf32>,
    %c0_7 = arith.constant 0 : index
    %c1 = arith.constant 1 : index
    %c0_8 = arith.constant 0 : index
    %4 = vector.load %arg7[%c0_7, %c1, %c0_8] : memref<2x18x128xf32, #tpu.memory_space<vmem>>, vector<2x16x128xf32>
    tpu.vector_store %arg7[%c0_7, %c1, %c0_8], %0 {strides = array<i32>} : memref<2x18x128xf32, #tpu.memory_space<vmem>>, vector<2x16x128xf32>,
    %5 = vector.shape_cast %0 : vector<2x16x128xf32> to vector<32x128xf32>
    %c0_9 = arith.constant 0 : index
    %c0_10 = arith.constant 0 : index
    %c0_11 = arith.constant 0 : index
    %6 = vector.load %arg7[%c0_9, %c0_10, %c0_11] : memref<2x18x128xf32, #tpu.memory_space<vmem>>, vector<2x16x128xf32>
    %7 = vector.shape_cast %6 : vector<2x16x128xf32> to vector<32x128xf32>
    %c0_12 = arith.constant 0 : index
    %c2 = arith.constant 2 : index
    %c0_13 = arith.constant 0 : index
    %8 = vector.load %arg7[%c0_12, %c2, %c0_13] : memref<2x18x128xf32, #tpu.memory_space<vmem>>, vector<2x16x128xf32>
    %9 = vector.shape_cast %8 : vector<2x16x128xf32> to vector<32x128xf32>
    %c0_14 = arith.constant 0 : index
    %c0_15 = arith.constant 0 : index
    %c0_16 = arith.constant 0 : index
    %10 = vector.load %arg3[%c0_14, %c0_15, %c0_16] : memref<4x128x128xf32, #tpu.memory_space<vmem>>, vector<1x128x128xf32>
    %11 = vector.shape_cast %10 : vector<1x128x128xf32> to vector<128x128xf32>
    %c1_17 = arith.constant 1 : index
    %c0_18 = arith.constant 0 : index
    %c0_19 = arith.constant 0 : index
    %12 = vector.load %arg3[%c1_17, %c0_18, %c0_19] : memref<4x128x128xf32, #tpu.memory_space<vmem>>, vector<1x128x128xf32>
    %13 = vector.shape_cast %12 : vector<1x128x128xf32> to vector<128x128xf32>
    %c2_20 = arith.constant 2 : index
    %c0_21 = arith.constant 0 : index
    %c0_22 = arith.constant 0 : index
    %14 = vector.load %arg3[%c2_20, %c0_21, %c0_22] : memref<4x128x128xf32, #tpu.memory_space<vmem>>, vector<1x128x128xf32>
    %15 = vector.shape_cast %14 : vector<1x128x128xf32> to vector<128x128xf32>
    %c3 = arith.constant 3 : index
    %c0_23 = arith.constant 0 : index
    %c0_24 = arith.constant 0 : index
    %16 = vector.load %arg3[%c3, %c0_23, %c0_24] : memref<4x128x128xf32, #tpu.memory_space<vmem>>, vector<1x128x128xf32>
    %17 = vector.shape_cast %16 : vector<1x128x128xf32> to vector<128x128xf32>
    %cst_25 = arith.constant dense<0.000000e+00> : vector<32x128xf32>
    %18 = tpu.matmul %5, %13, %cst_25 {dimension_numbers = #tpu.dot_dimension_numbers<[1], [0], [0], [1], [0, 0, 1, 1], [], []>} : vector<32x128xf32>, vector<128x128xf32>, vector<32x128xf32> -> vector<32x128xf32>
    %cst_26 = arith.constant dense<0.000000e+00> : vector<32x128xf32>
    %19 = tpu.matmul %7, %17, %cst_26 {dimension_numbers = #tpu.dot_dimension_numbers<[1], [0], [0], [1], [0, 0, 1, 1], [], []>} : vector<32x128xf32>, vector<128x128xf32>, vector<32x128xf32> -> vector<32x128xf32>
    %20 = arith.addf %18, %19 : vector<32x128xf32>
    %cst_27 = arith.constant dense<0.000000e+00> : vector<32x128xf32>
    %21 = tpu.matmul %5, %15, %cst_27 {dimension_numbers = #tpu.dot_dimension_numbers<[1], [0], [0], [1], [0, 0, 1, 1], [], []>} : vector<32x128xf32>, vector<128x128xf32>, vector<32x128xf32> -> vector<32x128xf32>
    %cst_28 = arith.constant dense<0.000000e+00> : vector<32x128xf32>
    %22 = tpu.matmul %9, %11, %cst_28 {dimension_numbers = #tpu.dot_dimension_numbers<[1], [0], [0], [1], [0, 0, 1, 1], [], []>} : vector<32x128xf32>, vector<128x128xf32>, vector<32x128xf32> -> vector<32x128xf32>
    %23 = arith.addf %21, %22 : vector<32x128xf32>
    %24 = tpu.concatenate %20, %23 in 1 : vector<32x128xf32>, vector<32x128xf32> -> vector<32x256xf32>
    %c0_i32 = arith.constant 0 : i32
    %25 = arith.cmpi eq, %arg1, %c0_i32 : i32
    %26 = arith.extui %25 : i1 to i32
    %c0_i32_29 = arith.constant 0 : i32
    %27 = arith.cmpi ne, %26, %c0_i32_29 : i32
    scf.if %27 {
      %c0_34 = arith.constant 0 : index
      %c0_35 = arith.constant 0 : index
      %34 = vector.load %arg4[%c0_34, %c0_35] : memref<1x256xf32, #tpu.memory_space<vmem>>, vector<1x256xf32>
      %35 = vector.broadcast %34 : vector<1x256xf32> to vector<32x256xf32>
      %36 = arith.addf %24, %35 : vector<32x256xf32>
      %c0_36 = arith.constant 0 : index
      %c0_37 = arith.constant 0 : index
      %37 = vector.load %arg6[%c0_36, %c0_37] : memref<32x256xf32, #tpu.memory_space<vmem>>, vector<32x256xf32>
      tpu.vector_store %arg6[%c0_36, %c0_37], %36 {strides = array<i32>} : memref<32x256xf32, #tpu.memory_space<vmem>>, vector<32x256xf32>,
    } else {
    }
    %c0_i32_30 = arith.constant 0 : i32
    %28 = arith.cmpi sgt, %arg1, %c0_i32_30 : i32
    %29 = arith.extui %28 : i1 to i32
    %c0_i32_31 = arith.constant 0 : i32
    %30 = arith.cmpi ne, %29, %c0_i32_31 : i32
    scf.if %30 {
      %c0_34 = arith.constant 0 : index
      %c0_35 = arith.constant 0 : index
      %34 = vector.load %arg6[%c0_34, %c0_35] : memref<32x256xf32, #tpu.memory_space<vmem>>, vector<32x256xf32>
      %35 = arith.addf %34, %24 : vector<32x256xf32>
      %c0_36 = arith.constant 0 : index
      %c0_37 = arith.constant 0 : index
      %36 = vector.load %arg6[%c0_36, %c0_37] : memref<32x256xf32, #tpu.memory_space<vmem>>, vector<32x256xf32>
      tpu.vector_store %arg6[%c0_36, %c0_37], %35 {strides = array<i32>} : memref<32x256xf32, #tpu.memory_space<vmem>>, vector<32x256xf32>,
    } else {
    }
    %c0_i32_32 = arith.constant 0 : i32
    %31 = arith.cmpi eq, %arg1, %c0_i32_32 : i32
    %32 = arith.extui %31 : i1 to i32
    %c0_i32_33 = arith.constant 0 : i32
    %33 = arith.cmpi ne, %32, %c0_i32_33 : i32
    scf.if %33 {
      %c0_34 = arith.constant 0 : index
      %c0_35 = arith.constant 0 : index
      %34 = vector.load %arg6[%c0_34, %c0_35] : memref<32x256xf32, #tpu.memory_space<vmem>>, vector<32x256xf32>
      %c0_36 = arith.constant 0 : index
      %c0_37 = arith.constant 0 : index
      %35 = vector.load %arg5[%c0_36, %c0_37] : memref<32x256xf32, #tpu.memory_space<vmem>>, vector<32x256xf32>
      tpu.vector_store %arg5[%c0_36, %c0_37], %34 {strides = array<i32>} : memref<32x256xf32, #tpu.memory_space<vmem>>, vector<32x256xf32>,
    } else {
    }
    return
  }
  func.func @transform_0(%arg0: i32, %arg1: i32) -> (i32, i32, i32) {
    %c0_i32 = arith.constant 0 : i32
    %c0_i32_0 = arith.constant 0 : i32
    return %arg0, %c0_i32, %arg1 : i32, i32, i32
  }
  func.func @transform_1(%arg0: i32, %arg1: i32) -> (i32, i32, i32) {
    %c0_i32 = arith.constant 0 : i32
    %c0_i32_0 = arith.constant 0 : i32
    %c0_i32_1 = arith.constant 0 : i32
    return %c0_i32, %arg1, %c0_i32_0 : i32, i32, i32
  }
  func.func @transform_2(%arg0: i32, %arg1: i32) -> (i32, i32) {
    %c0_i32 = arith.constant 0 : i32
    %c0_i32_0 = arith.constant 0 : i32
    %c0_i32_1 = arith.constant 0 : i32
    return %c0_i32, %c0_i32_0 : i32, i32
  }
  func.func @transform_3(%arg0: i32, %arg1: i32) -> (i32, i32) {
    %c0_i32 = arith.constant 0 : i32
    %c0_i32_0 = arith.constant 0 : i32
    return %arg0, %c0_i32 : i32, i32
  }
}

</mosaic_0001>

<llo_original>
// kernel: tpu_custom_call.1
$region0: #{tpu_custom_call.1}
  #allocation0 [shape = 'u32[]', space=smem, size = 0x4, offset = 0x4, fixed_abs, tag = 'smem constant byte address 0x4 - core index']
  #allocation1 [shape = 'u32[72,128]{1,0:T(1,128)}', space=vmem, size = 0x9000, scoped, tag = 'internal scratch']
  #allocation2 [shape = 'f32[32,256]{1,0:T(8,128)}', space=vmem, size = 0x8000, scoped, tag = 'scratch operand']
  #allocation3 [shape = 'f32[2,18,128]{2,1,0:T(8,128)}', space=vmem, size = 0x6000, scoped, tag = 'scratch operand']
  %s0 = inlined_call_operand.hbm [shape: f32[2,16,128], index: 0, kind: input, shape index: {}]
  %s1 = inlined_call_operand.hbm [shape: f32[4,128,128], index: 1, kind: input, shape index: {}]
  %s2 = inlined_call_operand.hbm [shape: f32[1,256], index: 2, kind: input, shape index: {}]
  %s3 = inlined_call_operand.hbm [shape: f32[32,256], index: 3, kind: output, shape index: {}]
  %s4 = sld [smem:[#allocation0]]
  $region46: #{tpu_custom_call.1} parent=0
    _
  %s6 = ssub.s32 1, %s4
  %s7 = scalar_select 0, %s6, %s4
  $region1: #{tpu_custom_call.1} parent=0
    #allocation4 [shape = 'u8[16384]{0}', space=vmem, size = 0x4000, scoped, tag = 'input window, operand 0, single buffered']
    #allocation5 [shape = 's32[1]{0}', space=sflag, size = 0x4, scoped, tag = 'scoped memory for tpu_custom_call.1']
    #allocation6 [shape = 's32[1]{0}', space=sflag, size = 0x4, scoped, tag = 'scoped memory for tpu_custom_call.1']
    #allocation7 [shape = 'u8[262144]{0}', space=vmem, size = 0x40000, scoped, tag = 'input window, operand 1, single buffered']
    #allocation8 [shape = 's32[1]{0}', space=sflag, size = 0x4, scoped, tag = 'scoped memory for tpu_custom_call.1']
    #allocation9 [shape = 'u8[1024]{0}', space=vmem, size = 0x400, scoped, tag = 'input window, operand 2, single buffered']
    #allocation10 [shape = 'u8[32768]{0}', space=vmem, size = 0x8000, scoped, tag = 'output window, operand 0, single buffered']
    %8 = vsyncpa [#allocation5], 0
    %9 = vsyncpa [#allocation8], 0
    %10 = vsyncpa [#allocation6], 0
    // Predicated region
    $region2: #{tpu_custom_call.1} parent=1 // pred_check
      _
    $region3: #{tpu_custom_call.1} parent=1 // pred_check_branch
      %12 = sbr.rel (0) target = $region5
    $region4: #{tpu_custom_call.1} parent=1 // pred_region
      %14 = vsyncadd [#allocation5], 0
      %s15 = sshll.u32 %s0, 4
      %s16 = int_to_ptr.hbm [resolvable:$true] %s15
      %s17 = sshll.u32 [#allocation4], 4
      %s18 = int_to_ptr.vmem [resolvable:$true] %s17
      %23 = dma.hbm_to_vmem [thread:$0]  %s16, 512, %s18, [#allocation5], 128, 128, 8
    $region5: #{tpu_custom_call.1} parent=1 // pred_fallthru
      _
    // Predicated region
    $region6: #{tpu_custom_call.1} parent=1 // pred_check
      _
    $region7: #{tpu_custom_call.1} parent=1 // pred_check_branch
      %25 = sbr.rel (0) target = $region9
    $region8: #{tpu_custom_call.1} parent=1 // pred_region
      %27 = vsyncadd [#allocation8], 0
      %s28 = sshll.u32 %s1, 4
      %s29 = int_to_ptr.hbm [resolvable:$true] %s28
      %s30 = sshll.u32 [#allocation7], 4
      %s31 = int_to_ptr.vmem [resolvable:$true] %s30
      %36 = dma.hbm_to_vmem [thread:$0]  %s29, 8192, %s31, [#allocation8], 128, 128, 8
    $region9: #{tpu_custom_call.1} parent=1 // pred_fallthru
      _
    // Predicated region
    $region10: #{tpu_custom_call.1} parent=1 // pred_check
      _
    $region11: #{tpu_custom_call.1} parent=1 // pred_check_branch
      %38 = sbr.rel (0) target = $region13
    $region12: #{tpu_custom_call.1} parent=1 // pred_region
      %40 = vsyncadd [#allocation8], 0
      %s42 = sshll.u32 %s2, 4
      %s43 = int_to_ptr.hbm [resolvable:$true] %s42
      %s44 = sshll.u32 [#allocation9], 4
      %s45 = int_to_ptr.vmem [resolvable:$true] %s44
      %47 = dma.hbm_to_vmem [thread:$0]  %s43, 32, %s45, [#allocation8]
    $region13: #{tpu_custom_call.1} parent=1 // pred_fallthru
      _
    // Predicated region
    $region14: #{tpu_custom_call.1} parent=1 // pred_check
      _
    $region15: #{tpu_custom_call.1} parent=1 // pred_check_branch
      %49 = sbr.rel (0) target = $region17
    $region16: #{tpu_custom_call.1} parent=1 // pred_region
      %51 = dma.done [#allocation5], 512
    $region17: #{tpu_custom_call.1} parent=1 // pred_fallthru
      _
    // Predicated region
    $region18: #{tpu_custom_call.1} parent=1 // pred_check
      _
    $region19: #{tpu_custom_call.1} parent=1 // pred_check_branch
      %53 = sbr.rel (0) target = $region21
    $region20: #{tpu_custom_call.1} parent=1 // pred_region
      %55 = dma.done [#allocation8], 8192
    $region21: #{tpu_custom_call.1} parent=1 // pred_fallthru
      _
    // Predicated region
    $region22: #{tpu_custom_call.1} parent=1 // pred_check
      _
    $region23: #{tpu_custom_call.1} parent=1 // pred_check_branch
      %57 = sbr.rel (0) target = $region25
    $region24: #{tpu_custom_call.1} parent=1 // pred_region
      %59 = dma.done [#allocation8], 32
    $region25: #{tpu_custom_call.1} parent=1 // pred_fallthru
      _
    %v60 = vld [vmem:[#allocation4] sm:$0xff]
    %v61 = vld [vmem:[#allocation4 + $0x8] sm:$0xff]
    %v62 = vld [vmem:[#allocation4 + $0x10] sm:$0xff]
    %v63 = vld [vmem:[#allocation4 + $0x18] sm:$0xff]
    %64 = vst [vmem:[#allocation3] sm:$0x1] 0.0
    %65 = vst [vmem:[#allocation3 + $0x18] sm:$0x1] 0.0
    %66 = vst [vmem:[#allocation3 + $0x11] sm:$0x1] 0.0
    %67 = vst [vmem:[#allocation3 + $0x29] sm:$0x1] 0.0
    %68 = vst [vmem:[#allocation3 + $0x1] sm:$0xff] %v60
    %69 = vst [vmem:[#allocation3 + $0x9] sm:$0xff] %v61
    %70 = vst [vmem:[#allocation3 + $0x19] sm:$0xff] %v62
    %71 = vst [vmem:[#allocation3 + $0x21] sm:$0xff] %v63
    %v72 = vld [vmem:[#allocation3] sm:$0xff]
    %v73 = vld [vmem:[#allocation3 + $0x8] sm:$0xff]
    %v74 = vld [vmem:[#allocation3 + $0x18] sm:$0xff]
    %v75 = vld [vmem:[#allocation3 + $0x20] sm:$0xff]
    %v76 = vld [vmem:[#allocation3 + $0x2] sm:$0xff]
    %v77 = vld [vmem:[#allocation3 + $0xa] sm:$0xff]
    %v78 = vld [vmem:[#allocation3 + $0x1a] sm:$0xff]
    %v79 = vld [vmem:[#allocation3 + $0x22] sm:$0xff]
    %v80 = vld [vmem:[#allocation7] sm:$0xff]
    %v81 = vld [vmem:[#allocation7 + $0x8] sm:$0xff]
    %v82 = vld [vmem:[#allocation7 + $0x10] sm:$0xff]
    %v83 = vld [vmem:[#allocation7 + $0x18] sm:$0xff]
    %v84 = vld [vmem:[#allocation7 + $0x20] sm:$0xff]
    %v85 = vld [vmem:[#allocation7 + $0x28] sm:$0xff]
    %v86 = vld [vmem:[#allocation7 + $0x30] sm:$0xff]
    %v87 = vld [vmem:[#allocation7 + $0x38] sm:$0xff]
    %v88 = vld [vmem:[#allocation7 + $0x40] sm:$0xff]
    %v89 = vld [vmem:[#allocation7 + $0x48] sm:$0xff]
    %v90 = vld [vmem:[#allocation7 + $0x50] sm:$0xff]
    %v91 = vld [vmem:[#allocation7 + $0x58] sm:$0xff]
    %v92 = vld [vmem:[#allocation7 + $0x60] sm:$0xff]
    %v93 = vld [vmem:[#allocation7 + $0x68] sm:$0xff]
    %v94 = vld [vmem:[#allocation7 + $0x70] sm:$0xff]
    %v95 = vld [vmem:[#allocation7 + $0x78] sm:$0xff]
    %s96 = scalar_lea.vmem [#allocation7], 128
    %v97 = vld [vmem:[%s96] sm:$0xff]
    %v98 = vld [vmem:[%s96 + $0x8] sm:$0xff]
    %v99 = vld [vmem:[%s96 + $0x10] sm:$0xff]
    %v100 = vld [vmem:[%s96 + $0x18] sm:$0xff]
    %v101 = vld [vmem:[%s96 + $0x20] sm:$0xff]
    %v102 = vld [vmem:[%s96 + $0x28] sm:$0xff]
    %v103 = vld [vmem:[%s96 + $0x30] sm:$0xff]
    %v104 = vld [vmem:[%s96 + $0x38] sm:$0xff]
    %v105 = vld [vmem:[%s96 + $0x40] sm:$0xff]
    %v106 = vld [vmem:[%s96 + $0x48] sm:$0xff]
    %v107 = vld [vmem:[%s96 + $0x50] sm:$0xff]
    %v108 = vld [vmem:[%s96 + $0x58] sm:$0xff]
    %v109 = vld [vmem:[%s96 + $0x60] sm:$0xff]
    %v110 = vld [vmem:[%s96 + $0x68] sm:$0xff]
    %v111 = vld [vmem:[%s96 + $0x70] sm:$0xff]
    %v112 = vld [vmem:[%s96 + $0x78] sm:$0xff]
    %s113 = scalar_lea.vmem [#allocation7], 256
    %v114 = vld [vmem:[%s113] sm:$0xff]
    %v115 = vld [vmem:[%s113 + $0x8] sm:$0xff]
    %v116 = vld [vmem:[%s113 + $0x10] sm:$0xff]
    %v117 = vld [vmem:[%s113 + $0x18] sm:$0xff]
    %v118 = vld [vmem:[%s113 + $0x20] sm:$0xff]
    %v119 = vld [vmem:[%s113 + $0x28] sm:$0xff]
    %v120 = vld [vmem:[%s113 + $0x30] sm:$0xff]
    %v121 = vld [vmem:[%s113 + $0x38] sm:$0xff]
    %v122 = vld [vmem:[%s113 + $0x40] sm:$0xff]
    %v123 = vld [vmem:[%s113 + $0x48] sm:$0xff]
    %v124 = vld [vmem:[%s113 + $0x50] sm:$0xff]
    %v125 = vld [vmem:[%s113 + $0x58] sm:$0xff]
    %v126 = vld [vmem:[%s113 + $0x60] sm:$0xff]
    %v127 = vld [vmem:[%s113 + $0x68] sm:$0xff]
    %v128 = vld [vmem:[%s113 + $0x70] sm:$0xff]
    %v129 = vld [vmem:[%s113 + $0x78] sm:$0xff]
    %s130 = scalar_lea.vmem [#allocation7], 384
    %v131 = vld [vmem:[%s130] sm:$0xff]
    %v132 = vld [vmem:[%s130 + $0x8] sm:$0xff]
    %v133 = vld [vmem:[%s130 + $0x10] sm:$0xff]
    %v134 = vld [vmem:[%s130 + $0x18] sm:$0xff]
    %v135 = vld [vmem:[%s130 + $0x20] sm:$0xff]
    %v136 = vld [vmem:[%s130 + $0x28] sm:$0xff]
    %v137 = vld [vmem:[%s130 + $0x30] sm:$0xff]
    %v138 = vld [vmem:[%s130 + $0x38] sm:$0xff]
    %v139 = vld [vmem:[%s130 + $0x40] sm:$0xff]
    %v140 = vld [vmem:[%s130 + $0x48] sm:$0xff]
    %v141 = vld [vmem:[%s130 + $0x50] sm:$0xff]
    %v142 = vld [vmem:[%s130 + $0x58] sm:$0xff]
    %v143 = vld [vmem:[%s130 + $0x60] sm:$0xff]
    %v144 = vld [vmem:[%s130 + $0x68] sm:$0xff]
    %v145 = vld [vmem:[%s130 + $0x70] sm:$0xff]
    %v146 = vld [vmem:[%s130 + $0x78] sm:$0xff]
    %147 = vmatpush.msra.mxu0 %v146
    %148 = vmatpush.msra.mxu0 %v145
    %149 = vmatpush.msra.mxu0 %v144
    %150 = vmatpush.msra.mxu0 %v143
    %151 = vmatpush.msra.mxu0 %v142
    %152 = vmatpush.msra.mxu0 %v141
    %153 = vmatpush.msra.mxu0 %v140
    %154 = vmatpush.msra.mxu0 %v139
    %155 = vmatpush.msra.mxu0 %v138
    %156 = vmatpush.msra.mxu0 %v137
    %157 = vmatpush.msra.mxu0 %v136
    %158 = vmatpush.msra.mxu0 %v135
    %159 = vmatpush.msra.mxu0 %v134
    %160 = vmatpush.msra.mxu0 %v133
    %161 = vmatpush.msra.mxu0 %v132
    %162 = vmatpush.msra.mxu0 %v131
    %163 = vmatmul.f32.gmra.mxu0 %v72
    %v164 = vpop.f32.mrf.mxu0
    %v165 = vadd.f32 0.0, %v164
    %166 = vmatmul.f32.gmra.mxu0 %v73
    %v167 = vpop.f32.mrf.mxu0
    %v168 = vadd.f32 0.0, %v167
    %169 = vmatmul.f32.gmra.mxu0 %v74
    %v170 = vpop.f32.mrf.mxu0
    %v171 = vadd.f32 0.0, %v170
    %172 = vmatmul.f32.gmra.mxu0 %v75
    %v173 = vpop.f32.mrf.mxu0
    %v174 = vadd.f32 0.0, %v173
    %175 = vdwg.mxu0
    %176 = vmatpush.msra.mxu0 %v112
    %177 = vmatpush.msra.mxu0 %v111
    %178 = vmatpush.msra.mxu0 %v110
    %179 = vmatpush.msra.mxu0 %v109
    %180 = vmatpush.msra.mxu0 %v108
    %181 = vmatpush.msra.mxu0 %v107
    %182 = vmatpush.msra.mxu0 %v106
    %183 = vmatpush.msra.mxu0 %v105
    %184 = vmatpush.msra.mxu0 %v104
    %185 = vmatpush.msra.mxu0 %v103
    %186 = vmatpush.msra.mxu0 %v102
    %187 = vmatpush.msra.mxu0 %v101
    %188 = vmatpush.msra.mxu0 %v100
    %189 = vmatpush.msra.mxu0 %v99
    %190 = vmatpush.msra.mxu0 %v98
    %191 = vmatpush.msra.mxu0 %v97
    %192 = vmatmul.f32.gmra.mxu0 %v60
    %v193 = vpop.f32.mrf.mxu0
    %v194 = vadd.f32 %v165, %v193
    %195 = vmatmul.f32.gmra.mxu0 %v61
    %v196 = vpop.f32.mrf.mxu0
    %v197 = vadd.f32 %v168, %v196
    %198 = vmatmul.f32.gmra.mxu0 %v62
    %v199 = vpop.f32.mrf.mxu0
    %v200 = vadd.f32 %v171, %v199
    %201 = vmatmul.f32.gmra.mxu0 %v63
    %v202 = vpop.f32.mrf.mxu0
    %v203 = vadd.f32 %v174, %v202
    %204 = vdwg.mxu0
    %205 = vmatpush.msra.mxu0 %v95
    %206 = vmatpush.msra.mxu0 %v94
    %207 = vmatpush.msra.mxu0 %v93
    %208 = vmatpush.msra.mxu0 %v92
    %209 = vmatpush.msra.mxu0 %v91
    %210 = vmatpush.msra.mxu0 %v90
    %211 = vmatpush.msra.mxu0 %v89
    %212 = vmatpush.msra.mxu0 %v88
    %213 = vmatpush.msra.mxu0 %v87
    %214 = vmatpush.msra.mxu0 %v86
    %215 = vmatpush.msra.mxu0 %v85
    %216 = vmatpush.msra.mxu0 %v84
    %217 = vmatpush.msra.mxu0 %v83
    %218 = vmatpush.msra.mxu0 %v82
    %219 = vmatpush.msra.mxu0 %v81
    %220 = vmatpush.msra.mxu0 %v80
    %221 = vmatmul.f32.gmra.mxu0 %v76
    %v222 = vpop.f32.mrf.mxu0
    %v223 = vadd.f32 0.0, %v222
    %224 = vmatmul.f32.gmra.mxu0 %v77
    %v225 = vpop.f32.mrf.mxu0
    %v226 = vadd.f32 0.0, %v225
    %227 = vmatmul.f32.gmra.mxu0 %v78
    %v228 = vpop.f32.mrf.mxu0
    %v229 = vadd.f32 0.0, %v228
    %230 = vmatmul.f32.gmra.mxu0 %v79
    %v231 = vpop.f32.mrf.mxu0
    %v232 = vadd.f32 0.0, %v231
    %233 = vdwg.mxu0
    %234 = vmatpush.msra.mxu0 %v129
    %235 = vmatpush.msra.mxu0 %v128
    %236 = vmatpush.msra.mxu0 %v127
    %237 = vmatpush.msra.mxu0 %v126
    %238 = vmatpush.msra.mxu0 %v125
    %239 = vmatpush.msra.mxu0 %v124
    %240 = vmatpush.msra.mxu0 %v123
    %241 = vmatpush.msra.mxu0 %v122
    %242 = vmatpush.msra.mxu0 %v121
    %243 = vmatpush.msra.mxu0 %v120
    %244 = vmatpush.msra.mxu0 %v119
    %245 = vmatpush.msra.mxu0 %v118
    %246 = vmatpush.msra.mxu0 %v117
    %247 = vmatpush.msra.mxu0 %v116
    %248 = vmatpush.msra.mxu0 %v115
    %249 = vmatpush.msra.mxu0 %v114
    %250 = vmatmul.f32.gmra.mxu0 %v60
    %v251 = vpop.f32.mrf.mxu0
    %v252 = vadd.f32 %v223, %v251
    %253 = vmatmul.f32.gmra.mxu0 %v61
    %v254 = vpop.f32.mrf.mxu0
    %v255 = vadd.f32 %v226, %v254
    %256 = vmatmul.f32.gmra.mxu0 %v62
    %v257 = vpop.f32.mrf.mxu0
    %v258 = vadd.f32 %v229, %v257
    %259 = vmatmul.f32.gmra.mxu0 %v63
    %v260 = vpop.f32.mrf.mxu0
    %v261 = vadd.f32 %v232, %v260
    %262 = vdwg.mxu0
    %p263 = scmp.eq.s32.totalorder 0, 0
    // Predicated region
    $region26: #{tpu_custom_call.1} parent=1 // pred_check
      %p264 = pneg %p263
    $region27: #{tpu_custom_call.1} parent=1 // pred_check_branch
      %266 = sbr.rel (%p264) target = $region29
    $region28: #{tpu_custom_call.1} parent=1 // pred_region
      %v267 = vld [vmem:[#allocation9] sm:$0x3]
      %v269 = vperm.slane %v267, 0
      %v270 = vperm.slane %v267, 1
      %v273 = vadd.f32 %v194, %v269
      %v274 = vadd.f32 %v252, %v270
      %v275 = vadd.f32 %v197, %v269
      %v276 = vadd.f32 %v255, %v270
      %v277 = vadd.f32 %v200, %v269
      %v278 = vadd.f32 %v258, %v270
      %v279 = vadd.f32 %v203, %v269
      %v280 = vadd.f32 %v261, %v270
      %281 = vst [vmem:[#allocation2] sm:$0xff] %v273
      %282 = vst [vmem:[#allocation2 + $0x8] sm:$0xff] %v274
      %283 = vst [vmem:[#allocation2 + $0x10] sm:$0xff] %v275
      %284 = vst [vmem:[#allocation2 + $0x18] sm:$0xff] %v276
      %285 = vst [vmem:[#allocation2 + $0x20] sm:$0xff] %v277
      %286 = vst [vmem:[#allocation2 + $0x28] sm:$0xff] %v278
      %287 = vst [vmem:[#allocation2 + $0x30] sm:$0xff] %v279
      %288 = vst [vmem:[#allocation2 + $0x38] sm:$0xff] %v280
    $region29: #{tpu_custom_call.1} parent=1 // pred_fallthru
      _
    %p289 = scmp.gt.s32.totalorder 0, 0
    // Predicated region
    $region30: #{tpu_custom_call.1} parent=1 // pred_check
      %p290 = pneg %p289
    $region31: #{tpu_custom_call.1} parent=1 // pred_check_branch
      %292 = sbr.rel (%p290) target = $region33
    $region32: #{tpu_custom_call.1} parent=1 // pred_region
      %v293 = vld [vmem:[#allocation2] sm:$0xff]
      %v294 = vld [vmem:[#allocation2 + $0x8] sm:$0xff]
      %v295 = vld [vmem:[#allocation2 + $0x10] sm:$0xff]
      %v296 = vld [vmem:[#allocation2 + $0x18] sm:$0xff]
      %v297 = vld [vmem:[#allocation2 + $0x20] sm:$0xff]
      %v298 = vld [vmem:[#allocation2 + $0x28] sm:$0xff]
      %v299 = vld [vmem:[#allocation2 + $0x30] sm:$0xff]
      %v300 = vld [vmem:[#allocation2 + $0x38] sm:$0xff]
      %v301 = vadd.f32 %v293, %v194
      %v302 = vadd.f32 %v294, %v252
      %v303 = vadd.f32 %v295, %v197
      %v304 = vadd.f32 %v296, %v255
      %v305 = vadd.f32 %v297, %v200
      %v306 = vadd.f32 %v298, %v258
      %v307 = vadd.f32 %v299, %v203
      %v308 = vadd.f32 %v300, %v261
      %309 = vst [vmem:[#allocation2] sm:$0xff] %v301
      %310 = vst [vmem:[#allocation2 + $0x8] sm:$0xff] %v302
      %311 = vst [vmem:[#allocation2 + $0x10] sm:$0xff] %v303
      %312 = vst [vmem:[#allocation2 + $0x18] sm:$0xff] %v304
      %313 = vst [vmem:[#allocation2 + $0x20] sm:$0xff] %v305
      %314 = vst [vmem:[#allocation2 + $0x28] sm:$0xff] %v306
      %315 = vst [vmem:[#allocation2 + $0x30] sm:$0xff] %v307
      %316 = vst [vmem:[#allocation2 + $0x38] sm:$0xff] %v308
    $region33: #{tpu_custom_call.1} parent=1 // pred_fallthru
      _
    // Predicated region
    $region34: #{tpu_custom_call.1} parent=1 // pred_check
      %p317 = pneg %p263
    $region35: #{tpu_custom_call.1} parent=1 // pred_check_branch
      %319 = sbr.rel (%p317) target = $region37
    $region36: #{tpu_custom_call.1} parent=1 // pred_region
      %v320 = vld [vmem:[#allocation2] sm:$0xff]
      %v321 = vld [vmem:[#allocation2 + $0x8] sm:$0xff]
      %v322 = vld [vmem:[#allocation2 + $0x10] sm:$0xff]
      %v323 = vld [vmem:[#allocation2 + $0x18] sm:$0xff]
      %v324 = vld [vmem:[#allocation2 + $0x20] sm:$0xff]
      %v325 = vld [vmem:[#allocation2 + $0x28] sm:$0xff]
      %v326 = vld [vmem:[#allocation2 + $0x30] sm:$0xff]
      %v327 = vld [vmem:[#allocation2 + $0x38] sm:$0xff]
      %328 = vst [vmem:[#allocation10] sm:$0xff] %v320
      %329 = vst [vmem:[#allocation10 + $0x8] sm:$0xff] %v321
      %330 = vst [vmem:[#allocation10 + $0x10] sm:$0xff] %v322
      %331 = vst [vmem:[#allocation10 + $0x18] sm:$0xff] %v323
      %332 = vst [vmem:[#allocation10 + $0x20] sm:$0xff] %v324
      %333 = vst [vmem:[#allocation10 + $0x28] sm:$0xff] %v325
      %334 = vst [vmem:[#allocation10 + $0x30] sm:$0xff] %v326
      %335 = vst [vmem:[#allocation10 + $0x38] sm:$0xff] %v327
    $region37: #{tpu_custom_call.1} parent=1 // pred_fallthru
      _
    // Predicated region
    $region38: #{tpu_custom_call.1} parent=1 // pred_check
      _
    $region39: #{tpu_custom_call.1} parent=1 // pred_check_branch
      %337 = sbr.rel (0) target = $region41
    $region40: #{tpu_custom_call.1} parent=1 // pred_region
      %339 = vsyncadd [#allocation6], 0
      %s340 = sshll.u32 [#allocation10], 4
      %s341 = int_to_ptr.vmem [resolvable:$true] %s340
      %s342 = sshll.u32 %s3, 4
      %s343 = int_to_ptr.hbm [resolvable:$true] %s342
      %348 = dma.vmem_to_hbm [thread:$0]  %s341, 1024, %s343, [#allocation6], 256, 256, 16
    $region41: #{tpu_custom_call.1} parent=1 // pred_fallthru
      _
    // Predicated region
    $region42: #{tpu_custom_call.1} parent=1 // pred_check
      _
    $region43: #{tpu_custom_call.1} parent=1 // pred_check_branch
      %350 = sbr.rel (0) target = $region45
    $region44: #{tpu_custom_call.1} parent=1 // pred_region
      %352 = dma.done [#allocation6], 1024
    $region45: #{tpu_custom_call.1} parent=1 // pred_fallthru
      _
    %353 = vsyncpa [#allocation5], 1
    %354 = vsyncpa [#allocation8], 1
    %355 = vsyncpa [#allocation6], 1

</llo_original>
